<compile_context>
chip_gen: v7x
topology: tpu7x:2x2x1
jax: 0.10.0
libtpu: 0.0.40
codegen_flags: <defaults>
</compile_context>

<pallas_src>
import jax
import jax.numpy as jnp
from jax.experimental import pallas as pl
from jax.experimental.pallas import tpu as pltpu


def _round_up(x: int, m: int) -> int:
    return ((x + m - 1) // m) * m


# ----------------------------------------------------------------------------
# Pallas kernel: fused 4-layer MLP
#   y = L4( relu( L3( relu( L2( relu( L1(x) ) ) ) ) ) )
# L1: (D_in -> 128), L2: (128 -> 256), L3: (256 -> 128), L4: (128 -> 1)
# Matmuls: bf16 operands, f32 accumulation. Head L4 runs on the VPU/XLU.
# ----------------------------------------------------------------------------
def _critic_mlp_kernel(x_ref,
                       w1_ref, b1_ref,
                       w2_ref, b2_ref,
                       w3_ref, b3_ref,
                       w4_ref, b4_ref,
                       o_ref):
    x = x_ref[...]                                                  # (TB, D_in) bf16

    h = jnp.dot(x, w1_ref[...], preferred_element_type=jnp.float32) + b1_ref[...]
    h = jnp.maximum(h, 0.0)

    h = jnp.dot(h.astype(jnp.bfloat16), w2_ref[...],
                preferred_element_type=jnp.float32) + b2_ref[...]
    h = jnp.maximum(h, 0.0)

    h = jnp.dot(h.astype(jnp.bfloat16), w3_ref[...],
                preferred_element_type=jnp.float32) + b3_ref[...]
    h = jnp.maximum(h, 0.0)

    # 128 -> 1 head: VPU multiply + lane reduction (skip an N=1 MXU pass).
    out = jnp.sum(h * w4_ref[...], axis=-1, keepdims=True) + b4_ref[...]
    o_ref[...] = out.astype(o_ref.dtype)


def critic_mlp(x_bf16, kernel_params):
    """x_bf16: (B, D_in) bf16 critic inputs. Returns (B, 1) f32 Q-values."""
    w1, b1, w2, b2, w3, b3, w4_row, b4 = kernel_params
    B, D_in = x_bf16.shape

    # Batch tile: big enough to feed the MXU at training batch sizes, rounded
    # to 16 rows (bf16 sublane packing). Small B collapses to a single tile.
    TB = min(512, _round_up(max(B, 1), 16))
    B_pad = _round_up(B, TB)
    if B_pad != B:
        x_bf16 = jnp.pad(x_bf16, ((0, B_pad - B), (0, 0)))
    grid = (B_pad // TB,)

    const2 = lambda i: (0, 0)  # weights/biases stay resident across batch tiles
    in_specs = [
        pl.BlockSpec((TB, D_in), lambda i: (i, 0)),   # x: tiled along batch
        pl.BlockSpec(w1.shape, const2),
        pl.BlockSpec(b1.shape, const2),
        pl.BlockSpec(w2.shape, const2),
        pl.BlockSpec(b2.shape, const2),
        pl.BlockSpec(w3.shape, const2),
        pl.BlockSpec(b3.shape, const2),
        pl.BlockSpec(w4_row.shape, const2),
        pl.BlockSpec(b4.shape, const2),
    ]
    out_specs = pl.BlockSpec((TB, 1), lambda i: (i, 0))

    flops = 2 * B_pad * (D_in * 128 + 128 * 256 + 256 * 128 + 128)
    bytes_accessed = (
        (w1.size + w2.size + w3.size) * 2                      # bf16 weights
        + (b1.size + b2.size + b3.size + w4_row.size + b4.size) * 4
        + B_pad * D_in * 2                                     # bf16 input
        + B_pad * 1 * 4                                        # f32 output
    )

    out = pl.pallas_call(
        _critic_mlp_kernel,
        out_shape=jax.ShapeDtypeStruct((B_pad, 1), jnp.float32),
        grid=grid,
        in_specs=in_specs,
        out_specs=out_specs,
        compiler_params=pltpu.CompilerParams(
            dimension_semantics=("parallel",)),
        cost_estimate=pl.CostEstimate(
            flops=int(flops), transcendentals=0,
            bytes_accessed=int(bytes_accessed)),
    )(x_bf16, w1, b1, w2, b2, w3, b3, w4_row, b4)

    return out[:B]


# ----------------------------------------------------------------------------
# Parameters (nn.Linear-style init) + one-time kernel-param preparation.
# ----------------------------------------------------------------------------
def init_critic_params(key, state_dim, action_dim):
    """f32 params matching nn.Linear default init: U(-1/sqrt(fan_in), +)."""
    dims = [state_dim + action_dim, 128, 256, 128, 1]
    params = []
    for i in range(4):
        fan_in, fan_out = dims[i], dims[i + 1]
        key, kw, kb = jax.random.split(key, 3)
        bound = 1.0 / jnp.sqrt(fan_in)
        w = jax.random.uniform(kw, (fan_in, fan_out), jnp.float32, -bound, bound)
        b = jax.random.uniform(kb, (1, fan_out), jnp.float32, -bound, bound)
        params.append((w, b))
    return params


def prepare_kernel_params(params, state_dim, max_action):
    """One-time transform: fold 1/max_action into w1's action rows, cast the
    matmul weights to bf16, and turn the (128,1) head into a (1,128) row."""
    (w1, b1), (w2, b2), (w3, b3), (w4, b4) = params
    w1 = w1.at[state_dim:, :].multiply(1.0 / max_action)
    return (
        w1.astype(jnp.bfloat16), b1,
        w2.astype(jnp.bfloat16), b2,
        w3.astype(jnp.bfloat16), b3,
        w4.T.astype(jnp.float32),        # (1, 128) row, used on the VPU in f32
        b4,
    )


def critic_forward(global_state, global_action, kernel_params):
    """global_state / global_action: lists of (B, d_i) f32 arrays per agent.
    The 1/max_action scaling is already folded into w1 (prepare_kernel_params),
    so the wrapper is a single fused concat + bf16 cast feeding the kernel."""
    x = jnp.concatenate(list(global_state) + list(global_action), axis=1)
    return critic_mlp(x.astype(jnp.bfloat16), kernel_params)


# Pure-JAX reference with the SAME bf16-operand / f32-accumulate numerics,
# used for a tight correctness check of the kernel.
def _critic_ref_bf16(global_state, global_action, kernel_params):
    w1, b1, w2, b2, w3, b3, w4_row, b4 = kernel_params
    x = jnp.concatenate(list(global_state) + list(global_action), axis=1)
    h = x.astype(jnp.bfloat16)
    h = jnp.dot(h, w1, preferred_element_type=jnp.float32) + b1
    h = jnp.maximum(h, 0.0)
    h = jnp.dot(h.astype(jnp.bfloat16), w2, preferred_element_type=jnp.float32) + b2
    h = jnp.maximum(h, 0.0)
    h = jnp.dot(h.astype(jnp.bfloat16), w3, preferred_element_type=jnp.float32) + b3
    h = jnp.maximum(h, 0.0)
    return jnp.sum(h * w4_row, axis=-1, keepdims=True) + b4


if __name__ == "__main__":
    # Small MADDPG-style setup: 2 agents, per-agent state dim 12, action dim 4.
    n_agents = 2
    per_state, per_action = 12, 4
    state_dim = n_agents * per_state      # 24 (global state dim)
    action_dim = n_agents * per_action    # 8  (global action dim)
    max_action = 2.0
    batch = 8

    key = jax.random.PRNGKey(0)
    key, kp = jax.random.split(key)
    params = init_critic_params(kp, state_dim, action_dim)
    kparams = prepare_kernel_params(params, state_dim, max_action)

    global_state, global_action = [], []
    for _ in range(n_agents):
        key, ks, ka = jax.random.split(key, 3)
        global_state.append(jax.random.normal(ks, (batch, per_state), jnp.float32))
        global_action.append(
            max_action * jax.random.uniform(ka, (batch, per_action), jnp.float32,
                                            -1.0, 1.0))

    q = critic_forward(global_state, global_action, kparams)
    q = jax.block_until_ready(q)

    q_ref = _critic_ref_bf16(global_state, global_action, kparams)
    assert q.shape == (batch, 1), q.shape
    assert jnp.allclose(q, q_ref, atol=1e-2, rtol=1e-2), (
        float(jnp.max(jnp.abs(q - q_ref))))

    print("KERNEL_OK")
</pallas_src>

<mosaic_0001>
module attributes {stable_mosaic.version = 11 : i64} {
  func.func @_critic_mlp_kernel(%arg0: i32, %arg1: memref<16x32xbf16, #tpu.memory_space<vmem>>, %arg2: memref<32x128xbf16, #tpu.memory_space<vmem>>, %arg3: memref<1x128xf32, #tpu.memory_space<vmem>>, %arg4: memref<128x256xbf16, #tpu.memory_space<vmem>>, %arg5: memref<1x256xf32, #tpu.memory_space<vmem>>, %arg6: memref<256x128xbf16, #tpu.memory_space<vmem>>, %arg7: memref<1x128xf32, #tpu.memory_space<vmem>>, %arg8: memref<1x128xf32, #tpu.memory_space<vmem>>, %arg9: memref<1x1xf32, #tpu.memory_space<vmem>>, %arg10: memref<16x1xf32, #tpu.memory_space<vmem>>) attributes {dimension_semantics = [#tpu.dimension_semantics<parallel>], iteration_bounds = array<i64: 1>, scalar_prefetch = 0 : i64, scratch_operands = 0 : i64, tpu.core_type = #tpu.core_type<tc>, window_params = [{transform_indices = @transform_0, window_bounds = array<i64: 16, 32>}, {pipeline_mode = #tpu.pipeline_mode<synchronous>, transform_indices = @transform_1, window_bounds = array<i64: 32, 128>}, {pipeline_mode = #tpu.pipeline_mode<synchronous>, transform_indices = @transform_2, window_bounds = array<i64: 1, 128>}, {pipeline_mode = #tpu.pipeline_mode<synchronous>, transform_indices = @transform_3, window_bounds = array<i64: 128, 256>}, {pipeline_mode = #tpu.pipeline_mode<synchronous>, transform_indices = @transform_4, window_bounds = array<i64: 1, 256>}, {pipeline_mode = #tpu.pipeline_mode<synchronous>, transform_indices = @transform_5, window_bounds = array<i64: 256, 128>}, {pipeline_mode = #tpu.pipeline_mode<synchronous>, transform_indices = @transform_6, window_bounds = array<i64: 1, 128>}, {pipeline_mode = #tpu.pipeline_mode<synchronous>, transform_indices = @transform_7, window_bounds = array<i64: 1, 128>}, {pipeline_mode = #tpu.pipeline_mode<synchronous>, transform_indices = @transform_8, window_bounds = array<i64: 1, 1>}, {transform_indices = @transform_9, window_bounds = array<i64: 16, 1>}]} {
    %c0 = arith.constant 0 : index
    %c0_0 = arith.constant 0 : index
    %0 = vector.load %arg1[%c0, %c0_0] : memref<16x32xbf16, #tpu.memory_space<vmem>>, vector<16x32xbf16>
    %c0_1 = arith.constant 0 : index
    %c0_2 = arith.constant 0 : index
    %1 = vector.load %arg2[%c0_1, %c0_2] : memref<32x128xbf16, #tpu.memory_space<vmem>>, vector<32x128xbf16>
    %cst = arith.constant dense<0.000000e+00> : vector<16x128xf32>
    %2 = tpu.matmul %0, %1, %cst {dimension_numbers = #tpu.dot_dimension_numbers<[1], [0], [0], [1], [0, 0, 1, 1], [], []>} : vector<16x32xbf16>, vector<32x128xbf16>, vector<16x128xf32> -> vector<16x128xf32>
    %c0_3 = arith.constant 0 : index
    %c0_4 = arith.constant 0 : index
    %3 = vector.load %arg3[%c0_3, %c0_4] : memref<1x128xf32, #tpu.memory_space<vmem>>, vector<1x128xf32>
    %4 = vector.broadcast %3 : vector<1x128xf32> to vector<16x128xf32>
    %5 = arith.addf %2, %4 : vector<16x128xf32>
    %cst_5 = arith.constant 0.000000e+00 : f32
    %6 = vector.broadcast %cst_5 : f32 to vector<16x128xf32>
    %7 = arith.maximumf %5, %6 : vector<16x128xf32>
    %8 = arith.truncf %7 : vector<16x128xf32> to vector<16x128xbf16>
    %c0_6 = arith.constant 0 : index
    %c0_7 = arith.constant 0 : index
    %9 = vector.load %arg4[%c0_6, %c0_7] : memref<128x256xbf16, #tpu.memory_space<vmem>>, vector<128x256xbf16>
    %cst_8 = arith.constant dense<0.000000e+00> : vector<16x256xf32>
    %10 = tpu.matmul %8, %9, %cst_8 {dimension_numbers = #tpu.dot_dimension_numbers<[1], [0], [0], [1], [0, 0, 1, 1], [], []>} : vector<16x128xbf16>, vector<128x256xbf16>, vector<16x256xf32> -> vector<16x256xf32>
    %c0_9 = arith.constant 0 : index
    %c0_10 = arith.constant 0 : index
    %11 = vector.load %arg5[%c0_9, %c0_10] : memref<1x256xf32, #tpu.memory_space<vmem>>, vector<1x256xf32>
    %12 = vector.broadcast %11 : vector<1x256xf32> to vector<16x256xf32>
    %13 = arith.addf %10, %12 : vector<16x256xf32>
    %cst_11 = arith.constant 0.000000e+00 : f32
    %14 = vector.broadcast %cst_11 : f32 to vector<16x256xf32>
    %15 = arith.maximumf %13, %14 : vector<16x256xf32>
    %16 = arith.truncf %15 : vector<16x256xf32> to vector<16x256xbf16>
    %c0_12 = arith.constant 0 : index
    %c0_13 = arith.constant 0 : index
    %17 = vector.load %arg6[%c0_12, %c0_13] : memref<256x128xbf16, #tpu.memory_space<vmem>>, vector<256x128xbf16>
    %cst_14 = arith.constant dense<0.000000e+00> : vector<16x128xf32>
    %18 = tpu.matmul %16, %17, %cst_14 {dimension_numbers = #tpu.dot_dimension_numbers<[1], [0], [0], [1], [0, 0, 1, 1], [], []>} : vector<16x256xbf16>, vector<256x128xbf16>, vector<16x128xf32> -> vector<16x128xf32>
    %c0_15 = arith.constant 0 : index
    %c0_16 = arith.constant 0 : index
    %19 = vector.load %arg7[%c0_15, %c0_16] : memref<1x128xf32, #tpu.memory_space<vmem>>, vector<1x128xf32>
    %20 = vector.broadcast %19 : vector<1x128xf32> to vector<16x128xf32>
    %21 = arith.addf %18, %20 : vector<16x128xf32>
    %cst_17 = arith.constant 0.000000e+00 : f32
    %22 = vector.broadcast %cst_17 : f32 to vector<16x128xf32>
    %23 = arith.maximumf %21, %22 : vector<16x128xf32>
    %c0_18 = arith.constant 0 : index
    %c0_19 = arith.constant 0 : index
    %24 = vector.load %arg8[%c0_18, %c0_19] : memref<1x128xf32, #tpu.memory_space<vmem>>, vector<1x128xf32>
    %25 = vector.broadcast %24 : vector<1x128xf32> to vector<16x128xf32>
    %26 = arith.mulf %23, %25 : vector<16x128xf32>
    %cst_20 = arith.constant dense<0.000000e+00> : vector<16xf32>
    %27 = vector.multi_reduction <add>, %26, %cst_20 [1] : vector<16x128xf32> to vector<16xf32>
    %28 = vector.shape_cast %27 : vector<16xf32> to vector<16x1xf32>
    %c0_21 = arith.constant 0 : index
    %c0_22 = arith.constant 0 : index
    %29 = vector.load %arg9[%c0_21, %c0_22] : memref<1x1xf32, #tpu.memory_space<vmem>>, vector<1x1xf32>
    %30 = vector.broadcast %29 : vector<1x1xf32> to vector<16x1xf32>
    %31 = arith.addf %28, %30 : vector<16x1xf32>
    %c0_23 = arith.constant 0 : index
    %c0_24 = arith.constant 0 : index
    %32 = vector.load %arg10[%c0_23, %c0_24] : memref<16x1xf32, #tpu.memory_space<vmem>>, vector<16x1xf32>
    tpu.vector_store %arg10[%c0_23, %c0_24], %31 {strides = array<i32>} : memref<16x1xf32, #tpu.memory_space<vmem>>, vector<16x1xf32>,
    return
  }
  func.func @transform_0(%arg0: i32) -> (i32, i32) {
    %c0_i32 = arith.constant 0 : i32
    %c0_i32_0 = arith.constant 0 : i32
    return %arg0, %c0_i32 : i32, i32
  }
  func.func @transform_1(%arg0: i32) -> (i32, i32) {
    %c0_i32 = arith.constant 0 : i32
    %c0_i32_0 = arith.constant 0 : i32
    %c0_i32_1 = arith.constant 0 : i32
    return %c0_i32, %c0_i32_0 : i32, i32
  }
  func.func @transform_2(%arg0: i32) -> (i32, i32) {
    %c0_i32 = arith.constant 0 : i32
    %c0_i32_0 = arith.constant 0 : i32
    %c0_i32_1 = arith.constant 0 : i32
    return %c0_i32, %c0_i32_0 : i32, i32
  }
  func.func @transform_3(%arg0: i32) -> (i32, i32) {
    %c0_i32 = arith.constant 0 : i32
    %c0_i32_0 = arith.constant 0 : i32
    %c0_i32_1 = arith.constant 0 : i32
    return %c0_i32, %c0_i32_0 : i32, i32
  }
  func.func @transform_4(%arg0: i32) -> (i32, i32) {
    %c0_i32 = arith.constant 0 : i32
    %c0_i32_0 = arith.constant 0 : i32
    %c0_i32_1 = arith.constant 0 : i32
    return %c0_i32, %c0_i32_0 : i32, i32
  }
  func.func @transform_5(%arg0: i32) -> (i32, i32) {
    %c0_i32 = arith.constant 0 : i32
    %c0_i32_0 = arith.constant 0 : i32
    %c0_i32_1 = arith.constant 0 : i32
    return %c0_i32, %c0_i32_0 : i32, i32
  }
  func.func @transform_6(%arg0: i32) -> (i32, i32) {
    %c0_i32 = arith.constant 0 : i32
    %c0_i32_0 = arith.constant 0 : i32
    %c0_i32_1 = arith.constant 0 : i32
    return %c0_i32, %c0_i32_0 : i32, i32
  }
  func.func @transform_7(%arg0: i32) -> (i32, i32) {
    %c0_i32 = arith.constant 0 : i32
    %c0_i32_0 = arith.constant 0 : i32
    %c0_i32_1 = arith.constant 0 : i32
    return %c0_i32, %c0_i32_0 : i32, i32
  }
  func.func @transform_8(%arg0: i32) -> (i32, i32) {
    %c0_i32 = arith.constant 0 : i32
    %c0_i32_0 = arith.constant 0 : i32
    %c0_i32_1 = arith.constant 0 : i32
    return %c0_i32, %c0_i32_0 : i32, i32
  }
  func.func @transform_9(%arg0: i32) -> (i32, i32) {
    %c0_i32 = arith.constant 0 : i32
    %c0_i32_0 = arith.constant 0 : i32
    return %arg0, %c0_i32 : i32, i32
  }
}

</mosaic_0001>

<llo_original>
// kernel: tpu_custom_call.1
$region0: #{tpu_custom_call.1}
  #allocation0 [shape = 'u32[]', space=smem, size = 0x4, offset = 0x4, fixed_abs, tag = 'smem constant byte address 0x4 - core index']
  #allocation1 [shape = 'u32[144,128]{1,0:T(1,128)}', space=vmem, size = 0x12000, scoped, tag = 'internal scratch']
  #allocation2 [shape = 'f32[1,1]{1,0:T(1,128)S(1)}', space=vmem, size = 0x200, scoped, tag = 'scoped memory for tpu_custom_call.1']
  %s0 = inlined_call_operand.hbm [shape: bf16[16,32], index: 0, kind: input, shape index: {}]
  %s1 = inlined_call_operand.hbm [shape: bf16[32,128], index: 1, kind: input, shape index: {}]
  %s2 = inlined_call_operand.vmem [shape: f32[1,128], index: 2, kind: input, shape index: {}]
  %s3 = inlined_call_operand.hbm [shape: bf16[128,256], index: 3, kind: input, shape index: {}]
  %s4 = inlined_call_operand.vmem [shape: f32[1,256], index: 4, kind: input, shape index: {}]
  %s5 = inlined_call_operand.hbm [shape: bf16[256,128], index: 5, kind: input, shape index: {}]
  %s6 = inlined_call_operand.vmem [shape: f32[1,128], index: 6, kind: input, shape index: {}]
  %s7 = inlined_call_operand.vmem [shape: f32[1,128], index: 7, kind: input, shape index: {}]
  %s8 = inlined_call_operand.<no memory space> [shape: f32[1,1], index: 8, kind: input, shape index: {}]
  %s9 = inlined_call_operand.vmem [shape: f32[16,1], index: 9, kind: output, shape index: {}]
  %s10 = sld [smem:[#allocation0]]
  $region62: #{tpu_custom_call.1} parent=0
    _
  %s12 = ssub.s32 1, %s10
  %s13 = scalar_select 0, %s12, %s10
  %v14 = vstv %s8
  %15 = vst [vmem:[#allocation2] sm:$0x1] %v14
  $region1: #{tpu_custom_call.1} parent=0
    #allocation3 [shape = 'u8[4096]{0}', space=vmem, size = 0x1000, scoped, tag = 'input window, operand 0, single buffered']
    #allocation4 [shape = 's32[1]{0}', space=sflag, size = 0x4, scoped, tag = 'scoped memory for tpu_custom_call.1']
    #allocation5 [shape = 'u8[8192]{0}', space=vmem, size = 0x2000, scoped, tag = 'input window, operand 1, single buffered']
    #allocation6 [shape = 's32[1]{0}', space=sflag, size = 0x4, scoped, tag = 'scoped memory for tpu_custom_call.1']
    #allocation7 [shape = 'u8[65536]{0}', space=vmem, size = 0x10000, scoped, tag = 'input window, operand 3, single buffered']
    #allocation8 [shape = 'u8[65536]{0}', space=vmem, size = 0x10000, scoped, tag = 'input window, operand 5, single buffered']
    #allocation9 [shape = 's32[1]{0}', space=sflag, size = 0x4, scoped, tag = 'scoped memory for tpu_custom_call.1']
    %16 = vsyncpa [#allocation4], 0
    %17 = vsyncpa [#allocation6], 0
    %18 = vsyncpa [#allocation9], 0
    // Predicated region
    $region2: #{tpu_custom_call.1} parent=1 // pred_check
      _
    $region3: #{tpu_custom_call.1} parent=1 // pred_check_branch
      %20 = sbr.rel (0) target = $region5
    $region4: #{tpu_custom_call.1} parent=1 // pred_region
      %s22 = ssub.s32 128, 128
      %23 = vsyncadd [#allocation4], %s22
      %s24 = sshll.u32 [#allocation3], 4
      %s25 = int_to_ptr.vmem [resolvable:$true] %s24
      %30 = dma.hbm_to_vmem [thread:$0]  %s0, 128, %s25, [#allocation4], 64, 64, 4
    $region5: #{tpu_custom_call.1} parent=1 // pred_fallthru
      _
    // Predicated region
    $region6: #{tpu_custom_call.1} parent=1 // pred_check
      _
    $region7: #{tpu_custom_call.1} parent=1 // pred_check_branch
      %32 = sbr.rel (0) target = $region9
    $region8: #{tpu_custom_call.1} parent=1 // pred_region
      %s34 = ssub.s32 256, 256
      %35 = vsyncadd [#allocation6], %s34
      %s36 = sshll.u32 [#allocation5], 4
      %s37 = int_to_ptr.vmem [resolvable:$true] %s36
      %42 = dma.hbm_to_vmem [thread:$0]  %s1, 256, %s37, [#allocation6], 64, 64, 4
    $region9: #{tpu_custom_call.1} parent=1 // pred_fallthru
      _
    // Predicated region
    $region10: #{tpu_custom_call.1} parent=1 // pred_check
      _
    $region11: #{tpu_custom_call.1} parent=1 // pred_check_branch
      %44 = sbr.rel (0) target = $region13
    $region12: #{tpu_custom_call.1} parent=1 // pred_region
      _
    $region13: #{tpu_custom_call.1} parent=1 // pred_fallthru
      _
    // Predicated region
    $region14: #{tpu_custom_call.1} parent=1 // pred_check
      _
    $region15: #{tpu_custom_call.1} parent=1 // pred_check_branch
      %46 = sbr.rel (0) target = $region17
    $region16: #{tpu_custom_call.1} parent=1 // pred_region
      %s48 = ssub.s32 2048, 2048
      %49 = vsyncadd [#allocation6], %s48
      %s50 = sshll.u32 [#allocation7], 4
      %s51 = int_to_ptr.vmem [resolvable:$true] %s50
      %56 = dma.hbm_to_vmem [thread:$0]  %s3, 2048, %s51, [#allocation6], 128, 128, 8
    $region17: #{tpu_custom_call.1} parent=1 // pred_fallthru
      _
    // Predicated region
    $region18: #{tpu_custom_call.1} parent=1 // pred_check
      _
    $region19: #{tpu_custom_call.1} parent=1 // pred_check_branch
      %58 = sbr.rel (0) target = $region21
    $region20: #{tpu_custom_call.1} parent=1 // pred_region
      _
    $region21: #{tpu_custom_call.1} parent=1 // pred_fallthru
      _
    // Predicated region
    $region22: #{tpu_custom_call.1} parent=1 // pred_check
      _
    $region23: #{tpu_custom_call.1} parent=1 // pred_check_branch
      %60 = sbr.rel (0) target = $region25
    $region24: #{tpu_custom_call.1} parent=1 // pred_region
      %s62 = ssub.s32 2048, 2048
      %63 = vsyncadd [#allocation9], %s62
      %s64 = sshll.u32 [#allocation8], 4
      %s65 = int_to_ptr.vmem [resolvable:$true] %s64
      %70 = dma.hbm_to_vmem [thread:$0]  %s5, 2048, %s65, [#allocation9], 64, 64, 4
    $region25: #{tpu_custom_call.1} parent=1 // pred_fallthru
      _
    // Predicated region
    $region26: #{tpu_custom_call.1} parent=1 // pred_check
      _
    $region27: #{tpu_custom_call.1} parent=1 // pred_check_branch
      %72 = sbr.rel (0) target = $region29
    $region28: #{tpu_custom_call.1} parent=1 // pred_region
      _
    $region29: #{tpu_custom_call.1} parent=1 // pred_fallthru
      _
    // Predicated region
    $region30: #{tpu_custom_call.1} parent=1 // pred_check
      _
    $region31: #{tpu_custom_call.1} parent=1 // pred_check_branch
      %74 = sbr.rel (0) target = $region33
    $region32: #{tpu_custom_call.1} parent=1 // pred_region
      _
    $region33: #{tpu_custom_call.1} parent=1 // pred_fallthru
      _
    // Predicated region
    $region34: #{tpu_custom_call.1} parent=1 // pred_check
      _
    $region35: #{tpu_custom_call.1} parent=1 // pred_check_branch
      %76 = sbr.rel (0) target = $region37
    $region36: #{tpu_custom_call.1} parent=1 // pred_region
      _
    $region37: #{tpu_custom_call.1} parent=1 // pred_fallthru
      _
    // Predicated region
    $region38: #{tpu_custom_call.1} parent=1 // pred_check
      _
    $region39: #{tpu_custom_call.1} parent=1 // pred_check_branch
      %78 = sbr.rel (0) target = $region41
    $region40: #{tpu_custom_call.1} parent=1 // pred_region
      %79 = dma.done [#allocation4], 128
    $region41: #{tpu_custom_call.1} parent=1 // pred_fallthru
      _
    // Predicated region
    $region42: #{tpu_custom_call.1} parent=1 // pred_check
      _
    $region43: #{tpu_custom_call.1} parent=1 // pred_check_branch
      %81 = sbr.rel (0) target = $region45
    $region44: #{tpu_custom_call.1} parent=1 // pred_region
      %82 = dma.done [#allocation6], 256
    $region45: #{tpu_custom_call.1} parent=1 // pred_fallthru
      _
    // Predicated region
    $region46: #{tpu_custom_call.1} parent=1 // pred_check
      _
    $region47: #{tpu_custom_call.1} parent=1 // pred_check_branch
      %84 = sbr.rel (0) target = $region49
    $region48: #{tpu_custom_call.1} parent=1 // pred_region
      %85 = dma.done [#allocation6], 2048
    $region49: #{tpu_custom_call.1} parent=1 // pred_fallthru
      _
    // Predicated region
    $region50: #{tpu_custom_call.1} parent=1 // pred_check
      _
    $region51: #{tpu_custom_call.1} parent=1 // pred_check_branch
      %87 = sbr.rel (0) target = $region53
    $region52: #{tpu_custom_call.1} parent=1 // pred_region
      %88 = dma.done [#allocation9], 2048
    $region53: #{tpu_custom_call.1} parent=1 // pred_fallthru
      _
    %v90 = vld [vmem:[#allocation3] sm:$0xf]
    %v91 = vld [vmem:[#allocation3 + $0x4] sm:$0xf]
    %v92 = vld [vmem:[#allocation5] sm:$0xf]
    %v93 = vld [vmem:[#allocation5 + $0x4] sm:$0xf]
    %v94 = vld [vmem:[#allocation5 + $0x8] sm:$0xf]
    %v95 = vld [vmem:[#allocation5 + $0xc] sm:$0xf]
    %v96 = vld [vmem:[%s2] sm:$0x1]
    %v98 = vlaneseq
    %v99 = vshrl.u32 %v98, 7
    %v100 = vsub.s32 0, %v99
    %v101 = vrot.slane %v96, %v100
    %v105 = vunpack.c.l.b16 %v90
    %v106 = vunpack.c.l.b16 %v91
    %v107 = vpack.c.b16 %v106, %v105
    %v112 = vunpack.c.l.b16 %v92
    %v113 = vunpack.c.l.b16 %v93
    %v114 = vunpack.c.l.b16 %v94
    %v115 = vunpack.c.l.b16 %v95
    %v116 = vpack.c.b16 %v113, %v112
    %v117 = vpack.c.b16 %v115, %v114
    %vm120 = vcmask 261120
    %v122 = vsel %vm120, %v107, 0
    %124 = vmatprep.subr.bf16.mxu0 0
    %125 = vmatpush1.bf16.msra.mxu0 %v116
    %126 = vmatprep.subr.bf16.mxu0 0
    %127 = vmatpush1.bf16.msra.mxu0 %v117
    %128 = vmatprep.subr.bf16.mxu0 0
    %129 = vmatpush1.bf16.msra.mxu0 0
    %130 = vmatprep.subr.bf16.mxu0 0
    %131 = vmatpush1.bf16.msra.mxu0 0
    %132 = vmatprep.subr.bf16.mxu0 0
    %133 = vmatpush1.bf16.msra.mxu0 0
    %134 = vmatprep.subr.bf16.mxu0 0
    %135 = vmatpush1.bf16.msra.mxu0 0
    %136 = vmatprep.subr.bf16.mxu0 0
    %137 = vmatpush1.bf16.msra.mxu0 0
    %138 = vmatprep.subr.bf16.mxu0 0
    %139 = vmatpush1.bf16.msra.mxu0 0
    %140 = vmatprep.subr.bf16.mxu0 0
    %141 = vmatpush1.bf16.msra.mxu0 0
    %142 = vmatprep.subr.bf16.mxu0 0
    %143 = vmatpush1.bf16.msra.mxu0 0
    %144 = vmatprep.subr.bf16.mxu0 0
    %145 = vmatpush1.bf16.msra.mxu0 0
    %146 = vmatprep.subr.bf16.mxu0 0
    %147 = vmatpush1.bf16.msra.mxu0 0
    %148 = vmatprep.subr.bf16.mxu0 0
    %149 = vmatpush1.bf16.msra.mxu0 0
    %150 = vmatprep.subr.bf16.mxu0 0
    %151 = vmatpush1.bf16.msra.mxu0 0
    %152 = vmatprep.subr.bf16.mxu0 0
    %153 = vmatpush1.bf16.msra.mxu0 0
    %154 = vmatprep.subr.bf16.mxu0 0
    %155 = vmatpush1.bf16.msra.mxu0 0
    %156 = vmatprep.mubr.bf16.mxu0 0
    %157 = vmatmul.mubr.bf16.gmra.mrb[0].mxu0 %v122
    %v158 = vpop.f32.mrb[0].mxu0
    %v159 = vadd.f32 %v101, %v158
    %v160 = vpop.f32.mrb[0].mxu0
    %v161 = vpop.f32.mrb[0].mxu0
    %v162 = vadd.f32 %v101, %v161
    %v163 = vpop.f32.mrb[0].mxu0
    %164 = vdwg.mxu0
    %v165 = vmax.f32 %v159, 0.0
    %v166 = vmax.f32 %v162, 0.0
    %v167 = vpack.c.bf16 %v166, %v165
    %v168 = vld [vmem:[#allocation7] sm:$0xff]
    %v169 = vld [vmem:[#allocation7 + $0x8] sm:$0xff]
    %v170 = vld [vmem:[#allocation7 + $0x10] sm:$0xff]
    %v171 = vld [vmem:[#allocation7 + $0x18] sm:$0xff]
    %v172 = vld [vmem:[#allocation7 + $0x20] sm:$0xff]
    %v173 = vld [vmem:[#allocation7 + $0x28] sm:$0xff]
    %v174 = vld [vmem:[#allocation7 + $0x30] sm:$0xff]
    %v175 = vld [vmem:[#allocation7 + $0x38] sm:$0xff]
    %v176 = vld [vmem:[#allocation7 + $0x40] sm:$0xff]
    %v177 = vld [vmem:[#allocation7 + $0x48] sm:$0xff]
    %v178 = vld [vmem:[#allocation7 + $0x50] sm:$0xff]
    %v179 = vld [vmem:[#allocation7 + $0x58] sm:$0xff]
    %v180 = vld [vmem:[#allocation7 + $0x60] sm:$0xff]
    %v181 = vld [vmem:[#allocation7 + $0x68] sm:$0xff]
    %v182 = vld [vmem:[#allocation7 + $0x70] sm:$0xff]
    %v183 = vld [vmem:[#allocation7 + $0x78] sm:$0xff]
    %v184 = vld [vmem:[%s4] sm:$0x3]
    %v186 = vlaneseq
    %v187 = vshrl.u32 %v186, 7
    %v188 = vsub.s32 0, %v187
    %v189 = vrot.slane %v184, %v188
    %v190 = vlaneseq
    %v191 = vshrl.u32 %v190, 7
    %v192 = vsub.s32 1, %v191
    %v193 = vrot.slane %v184, %v192
    %v212 = vunpack.c.l.b16 %v168
    %v213 = vunpack.c.h.b16 %v168
    %v214 = vunpack.c.l.b16 %v169
    %v215 = vunpack.c.h.b16 %v169
    %v216 = vunpack.c.l.b16 %v170
    %v217 = vunpack.c.h.b16 %v170
    %v218 = vunpack.c.l.b16 %v171
    %v219 = vunpack.c.h.b16 %v171
    %v220 = vunpack.c.l.b16 %v172
    %v221 = vunpack.c.h.b16 %v172
    %v222 = vunpack.c.l.b16 %v173
    %v223 = vunpack.c.h.b16 %v173
    %v224 = vunpack.c.l.b16 %v174
    %v225 = vunpack.c.h.b16 %v174
    %v226 = vunpack.c.l.b16 %v175
    %v227 = vunpack.c.h.b16 %v175
    %v228 = vunpack.c.l.b16 %v176
    %v229 = vunpack.c.h.b16 %v176
    %v230 = vunpack.c.l.b16 %v177
    %v231 = vunpack.c.h.b16 %v177
    %v232 = vunpack.c.l.b16 %v178
    %v233 = vunpack.c.h.b16 %v178
    %v234 = vunpack.c.l.b16 %v179
    %v235 = vunpack.c.h.b16 %v179
    %v236 = vunpack.c.l.b16 %v180
    %v237 = vunpack.c.h.b16 %v180
    %v238 = vunpack.c.l.b16 %v181
    %v239 = vunpack.c.h.b16 %v181
    %v240 = vunpack.c.l.b16 %v182
    %v241 = vunpack.c.h.b16 %v182
    %v242 = vunpack.c.l.b16 %v183
    %v243 = vunpack.c.h.b16 %v183
    %v244 = vpack.c.b16 %v214, %v212
    %v245 = vpack.c.b16 %v215, %v213
    %v246 = vpack.c.b16 %v218, %v216
    %v247 = vpack.c.b16 %v219, %v217
    %v248 = vpack.c.b16 %v222, %v220
    %v249 = vpack.c.b16 %v223, %v221
    %v250 = vpack.c.b16 %v226, %v224
    %v251 = vpack.c.b16 %v227, %v225
    %v252 = vpack.c.b16 %v230, %v228
    %v253 = vpack.c.b16 %v231, %v229
    %v254 = vpack.c.b16 %v234, %v232
    %v255 = vpack.c.b16 %v235, %v233
    %v256 = vpack.c.b16 %v238, %v236
    %v257 = vpack.c.b16 %v239, %v237
    %v258 = vpack.c.b16 %v242, %v240
    %v259 = vpack.c.b16 %v243, %v241
    %276 = vmatprep.subr.bf16.mxu0 %v245
    %277 = vmatpush1.bf16.msra.mxu0 %v244
    %278 = vmatprep.subr.bf16.mxu0 %v247
    %279 = vmatpush1.bf16.msra.mxu0 %v246
    %280 = vmatprep.subr.bf16.mxu0 %v249
    %281 = vmatpush1.bf16.msra.mxu0 %v248
    %282 = vmatprep.subr.bf16.mxu0 %v251
    %283 = vmatpush1.bf16.msra.mxu0 %v250
    %284 = vmatprep.subr.bf16.mxu0 %v253
    %285 = vmatpush1.bf16.msra.mxu0 %v252
    %286 = vmatprep.subr.bf16.mxu0 %v255
    %287 = vmatpush1.bf16.msra.mxu0 %v254
    %288 = vmatprep.subr.bf16.mxu0 %v257
    %289 = vmatpush1.bf16.msra.mxu0 %v256
    %290 = vmatprep.subr.bf16.mxu0 %v259
    %291 = vmatpush1.bf16.msra.mxu0 %v258
    %292 = vmatprep.subr.bf16.mxu0 0
    %293 = vmatpush1.bf16.msra.mxu0 0
    %294 = vmatprep.subr.bf16.mxu0 0
    %295 = vmatpush1.bf16.msra.mxu0 0
    %296 = vmatprep.subr.bf16.mxu0 0
    %297 = vmatpush1.bf16.msra.mxu0 0
    %298 = vmatprep.subr.bf16.mxu0 0
    %299 = vmatpush1.bf16.msra.mxu0 0
    %300 = vmatprep.subr.bf16.mxu0 0
    %301 = vmatpush1.bf16.msra.mxu0 0
    %302 = vmatprep.subr.bf16.mxu0 0
    %303 = vmatpush1.bf16.msra.mxu0 0
    %304 = vmatprep.subr.bf16.mxu0 0
    %305 = vmatpush1.bf16.msra.mxu0 0
    %306 = vmatprep.subr.bf16.mxu0 0
    %307 = vmatpush1.bf16.msra.mxu0 0
    %308 = vmatprep.mubr.bf16.mxu0 0
    %309 = vmatmul.mubr.bf16.gmra.mrb[0].mxu0 %v167
    %v310 = vpop.f32.mrb[0].mxu0
    %v311 = vadd.f32 %v189, %v310
    %v312 = vpop.f32.mrb[0].mxu0
    %v313 = vadd.f32 %v193, %v312
    %v314 = vpop.f32.mrb[0].mxu0
    %v315 = vadd.f32 %v189, %v314
    %v316 = vpop.f32.mrb[0].mxu0
    %v317 = vadd.f32 %v193, %v316
    %318 = vdwg.mxu0
    %v319 = vmax.f32 %v311, 0.0
    %v320 = vmax.f32 %v313, 0.0
    %v321 = vmax.f32 %v315, 0.0
    %v322 = vmax.f32 %v317, 0.0
    %v323 = vpack.c.bf16 %v321, %v319
    %v324 = vpack.c.bf16 %v322, %v320
    %v325 = vld [vmem:[#allocation8] sm:$0xf]
    %v326 = vld [vmem:[#allocation8 + $0x4] sm:$0xf]
    %v327 = vld [vmem:[#allocation8 + $0x8] sm:$0xf]
    %v328 = vld [vmem:[#allocation8 + $0xc] sm:$0xf]
    %v329 = vld [vmem:[#allocation8 + $0x10] sm:$0xf]
    %v330 = vld [vmem:[#allocation8 + $0x14] sm:$0xf]
    %v331 = vld [vmem:[#allocation8 + $0x18] sm:$0xf]
    %v332 = vld [vmem:[#allocation8 + $0x1c] sm:$0xf]
    %v333 = vld [vmem:[#allocation8 + $0x20] sm:$0xf]
    %v334 = vld [vmem:[#allocation8 + $0x24] sm:$0xf]
    %v335 = vld [vmem:[#allocation8 + $0x28] sm:$0xf]
    %v336 = vld [vmem:[#allocation8 + $0x2c] sm:$0xf]
    %v337 = vld [vmem:[#allocation8 + $0x30] sm:$0xf]
    %v338 = vld [vmem:[#allocation8 + $0x34] sm:$0xf]
    %v339 = vld [vmem:[#allocation8 + $0x38] sm:$0xf]
    %v340 = vld [vmem:[#allocation8 + $0x3c] sm:$0xf]
    %v341 = vld [vmem:[#allocation8 + $0x40] sm:$0xf]
    %v342 = vld [vmem:[#allocation8 + $0x44] sm:$0xf]
    %v343 = vld [vmem:[#allocation8 + $0x48] sm:$0xf]
    %v344 = vld [vmem:[#allocation8 + $0x4c] sm:$0xf]
    %v345 = vld [vmem:[#allocation8 + $0x50] sm:$0xf]
    %v346 = vld [vmem:[#allocation8 + $0x54] sm:$0xf]
    %v347 = vld [vmem:[#allocation8 + $0x58] sm:$0xf]
    %v348 = vld [vmem:[#allocation8 + $0x5c] sm:$0xf]
    %v349 = vld [vmem:[#allocation8 + $0x60] sm:$0xf]
    %v350 = vld [vmem:[#allocation8 + $0x64] sm:$0xf]
    %v351 = vld [vmem:[#allocation8 + $0x68] sm:$0xf]
    %v352 = vld [vmem:[#allocation8 + $0x6c] sm:$0xf]
    %v353 = vld [vmem:[#allocation8 + $0x70] sm:$0xf]
    %v354 = vld [vmem:[#allocation8 + $0x74] sm:$0xf]
    %v355 = vld [vmem:[#allocation8 + $0x78] sm:$0xf]
    %v356 = vld [vmem:[#allocation8 + $0x7c] sm:$0xf]
    %v357 = vld [vmem:[%s6] sm:$0x1]
    %v359 = vlaneseq
    %v360 = vshrl.u32 %v359, 7
    %v361 = vsub.s32 0, %v360
    %v362 = vrot.slane %v357, %v361
    %v396 = vunpack.c.l.b16 %v325
    %v397 = vunpack.c.l.b16 %v326
    %v398 = vunpack.c.l.b16 %v327
    %v399 = vunpack.c.l.b16 %v328
    %v400 = vunpack.c.l.b16 %v329
    %v401 = vunpack.c.l.b16 %v330
    %v402 = vunpack.c.l.b16 %v331
    %v403 = vunpack.c.l.b16 %v332
    %v404 = vunpack.c.l.b16 %v333
    %v405 = vunpack.c.l.b16 %v334
    %v406 = vunpack.c.l.b16 %v335
    %v407 = vunpack.c.l.b16 %v336
    %v408 = vunpack.c.l.b16 %v337
    %v409 = vunpack.c.l.b16 %v338
    %v410 = vunpack.c.l.b16 %v339
    %v411 = vunpack.c.l.b16 %v340
    %v412 = vunpack.c.l.b16 %v341
    %v413 = vunpack.c.l.b16 %v342
    %v414 = vunpack.c.l.b16 %v343
    %v415 = vunpack.c.l.b16 %v344
    %v416 = vunpack.c.l.b16 %v345
    %v417 = vunpack.c.l.b16 %v346
    %v418 = vunpack.c.l.b16 %v347
    %v419 = vunpack.c.l.b16 %v348
    %v420 = vunpack.c.l.b16 %v349
    %v421 = vunpack.c.l.b16 %v350
    %v422 = vunpack.c.l.b16 %v351
    %v423 = vunpack.c.l.b16 %v352
    %v424 = vunpack.c.l.b16 %v353
    %v425 = vunpack.c.l.b16 %v354
    %v426 = vunpack.c.l.b16 %v355
    %v427 = vunpack.c.l.b16 %v356
    %v428 = vpack.c.b16 %v397, %v396
    %v429 = vpack.c.b16 %v399, %v398
    %v430 = vpack.c.b16 %v401, %v400
    %v431 = vpack.c.b16 %v403, %v402
    %v432 = vpack.c.b16 %v405, %v404
    %v433 = vpack.c.b16 %v407, %v406
    %v434 = vpack.c.b16 %v409, %v408
    %v435 = vpack.c.b16 %v411, %v410
    %v436 = vpack.c.b16 %v413, %v412
    %v437 = vpack.c.b16 %v415, %v414
    %v438 = vpack.c.b16 %v417, %v416
    %v439 = vpack.c.b16 %v419, %v418
    %v440 = vpack.c.b16 %v421, %v420
    %v441 = vpack.c.b16 %v423, %v422
    %v442 = vpack.c.b16 %v425, %v424
    %v443 = vpack.c.b16 %v427, %v426
    %460 = vmatprep.subr.bf16.mxu0 0
    %461 = vmatpush1.bf16.msra.mxu0 %v428
    %462 = vmatprep.subr.bf16.mxu0 0
    %463 = vmatpush1.bf16.msra.mxu0 %v429
    %464 = vmatprep.subr.bf16.mxu0 0
    %465 = vmatpush1.bf16.msra.mxu0 %v430
    %466 = vmatprep.subr.bf16.mxu0 0
    %467 = vmatpush1.bf16.msra.mxu0 %v431
    %468 = vmatprep.subr.bf16.mxu0 0
    %469 = vmatpush1.bf16.msra.mxu0 %v432
    %470 = vmatprep.subr.bf16.mxu0 0
    %471 = vmatpush1.bf16.msra.mxu0 %v433
    %472 = vmatprep.subr.bf16.mxu0 0
    %473 = vmatpush1.bf16.msra.mxu0 %v434
    %474 = vmatprep.subr.bf16.mxu0 0
    %475 = vmatpush1.bf16.msra.mxu0 %v435
    %476 = vmatprep.subr.bf16.mxu0 0
    %477 = vmatpush1.bf16.msra.mxu0 %v436
    %478 = vmatprep.subr.bf16.mxu0 0
    %479 = vmatpush1.bf16.msra.mxu0 %v437
    %480 = vmatprep.subr.bf16.mxu0 0
    %481 = vmatpush1.bf16.msra.mxu0 %v438
    %482 = vmatprep.subr.bf16.mxu0 0
    %483 = vmatpush1.bf16.msra.mxu0 %v439
    %484 = vmatprep.subr.bf16.mxu0 0
    %485 = vmatpush1.bf16.msra.mxu0 %v440
    %486 = vmatprep.subr.bf16.mxu0 0
    %487 = vmatpush1.bf16.msra.mxu0 %v441
    %488 = vmatprep.subr.bf16.mxu0 0
    %489 = vmatpush1.bf16.msra.mxu0 %v442
    %490 = vmatprep.subr.bf16.mxu0 0
    %491 = vmatpush1.bf16.msra.mxu0 %v443
    %492 = vmatprep.mubr.bf16.mxu0 %v324
    %493 = vmatmul.mubr.bf16.gmra.mrb[0].mxu0 %v323
    %v494 = vpop.f32.mrb[0].mxu0
    %v495 = vadd.f32 %v362, %v494
    %v496 = vpop.f32.mrb[0].mxu0
    %v497 = vpop.f32.mrb[0].mxu0
    %v498 = vadd.f32 %v362, %v497
    %v499 = vpop.f32.mrb[0].mxu0
    %500 = vdwg.mxu0
    %v501 = vmax.f32 %v495, 0.0
    %v502 = vmax.f32 %v498, 0.0
    %v503 = vld [vmem:[%s7] sm:$0x1]
    %v505 = vlaneseq
    %v506 = vshrl.u32 %v505, 7
    %v507 = vsub.s32 0, %v506
    %v508 = vrot.slane %v503, %v507
    %v510 = vmul.f32 %v501, %v508
    %v511 = vmul.f32 %v502, %v508
    %512 = vadd.xlane.f32.xlu0 %v510
    %v513 = vpop.xlane.xlu0 %512
    %514 = vadd.xlane.f32.xlu0 %v511
    %v515 = vpop.xlane.xlu0 %514
    %v516 = vld [vmem:[#allocation2] sm:$0x1]
    %v518 = vlaneseq
    %v519 = vshrl.u32 %v518, 7
    %v520 = vsub.s32 0, %v519
    %v521 = vrot.slane %v516, %v520
    %v523 = vadd.f32 %v513, %v521
    %v524 = vadd.f32 %v515, %v521
    %vm525 = vcmask 7168
    %526 = vst.msk [vmem:[%s9] sm:$0xff] %vm525, %v523
    %527 = vst.msk [vmem:[%s9 + $0x8] sm:$0xff] %vm525, %v524
    // Predicated region
    $region54: #{tpu_custom_call.1} parent=1 // pred_check
      _
    $region55: #{tpu_custom_call.1} parent=1 // pred_check_branch
      %529 = sbr.rel (0) target = $region57
    $region56: #{tpu_custom_call.1} parent=1 // pred_region
      _
    $region57: #{tpu_custom_call.1} parent=1 // pred_fallthru
      _
    // Predicated region
    $region58: #{tpu_custom_call.1} parent=1 // pred_check
      _
    $region59: #{tpu_custom_call.1} parent=1 // pred_check_branch
      %531 = sbr.rel (0) target = $region61
    $region60: #{tpu_custom_call.1} parent=1 // pred_region
      _
    $region61: #{tpu_custom_call.1} parent=1 // pred_fallthru
      _
    %532 = vsyncpa [#allocation4], 1
    %533 = vsyncpa [#allocation6], 1
    %534 = vsyncpa [#allocation9], 1

</llo_original>
